<compile_context>
chip_gen: v6e
topology: v6e:2x2x1
jax: 0.10.0
libtpu: 0.0.40
codegen_flags: <defaults>
</compile_context>

<pallas_src>
import functools

import jax
import jax.numpy as jnp
from jax.experimental import pallas as pl
from jax.experimental.pallas import tpu as pltpu


# ---------------------------------------------------------------------------
# Hardware-aware defaults
# ---------------------------------------------------------------------------
_MIB = 1024 * 1024


def _hw_budget():
    """Pick (target_tm, target_tf, vmem_limit_bytes) from the VMEM capacity."""
    cap = None
    try:
        info = pltpu.get_tpu_info()
        cap = int(getattr(info, "vmem_capacity_bytes"))
    except Exception:
        cap = None
    if cap is None:
        cap = 64 * _MIB  # conservative (v7x-sized) fallback
    if cap <= 64 * _MIB:
        # v7x: 64 MiB / TC -> smaller F tile, moderate token tile.
        return {"target_tm": 384, "target_tf": 256, "vmem_limit": int(cap * 0.75)}
    # v5e / v6e: 128 MiB -> bigger token tile for weight reuse.
    return {"target_tm": 512, "target_tf": 512, "vmem_limit": int(cap * 0.75)}


def _vmem_estimate(tm, tf, H, w_bytes, x_bytes, out_bytes, acc_scratch):
    """Rough double-buffered VMEM footprint of one grid step (bytes)."""
    w12 = 2 * H * 2 * tf * w_bytes          # fused [W1^T|W2^T] tile, 2 buffers
    w3 = 2 * tf * H * w_bytes               # W3^T tile, 2 buffers
    b12 = 2 * 2 * tf * 4
    xwin = 2 * tm * H * x_bytes             # input token tile
    owin = 2 * tm * H * out_bytes           # output token tile
    xn = tm * H * w_bytes                   # normalized-activation scratch
    acc = tm * H * 4 if acc_scratch else 0  # optional f32 accumulator
    misc = 4 * H * 4                        # wn, b3
    return w12 + w3 + b12 + xwin + owin + xn + acc + misc


# ---------------------------------------------------------------------------
# Kernel
# ---------------------------------------------------------------------------
def _ffn_kernel(x_ref, wn_ref, w12_ref, b12_ref, w3_ref, b3_ref,
                o_ref, xn_ref, *acc_scratch, eps, tf):
    """One (token-tile, F-tile) grid step.

    x_ref   : (tm, H)      input token tile (constant across the F axis)
    wn_ref  : (1, H)       RMSNorm weight
    w12_ref : (H, 2*tf)    contiguous [W1^T tile | W2^T tile] block
    b12_ref : (1, 2*tf)    [b1 tile | b2 tile]
    w3_ref  : (tf, H)      W3^T tile
    b3_ref  : (1, H)       b3
    o_ref   : (tm, H)      output tile (VMEM-resident across the F axis)
    xn_ref  : (tm, H)      scratch (weights dtype): normalized activations
    acc_scratch : optional (tm, H) f32 accumulator (only when o_ref is not f32)
    """
    acc_in_out = not acc_scratch           # trace-time constant
    acc_ref = o_ref if acc_in_out else acc_scratch[0]

    f = pl.program_id(1)
    nf = pl.num_programs(1)

    # ---- init (first F tile of this token tile): RMSNorm + zero accumulator
    @pl.when(f == 0)
    def _():
        x = x_ref[...].astype(jnp.float32)
        ms = jnp.mean(x * x, axis=-1, keepdims=True)
        inv_rms = jax.lax.rsqrt(ms + eps)
        xn = x * inv_rms * wn_ref[...].astype(jnp.float32)
        xn_ref[...] = xn.astype(xn_ref.dtype)      # cast once, not per F step
        acc_ref[...] = jnp.zeros_like(acc_ref)

    # ---- fused gate/up matmul:  (tm, H) @ (H, 2*tf) -> (tm, 2*tf)
    xn = xn_ref[...]                               # already in the weights dtype
    gu = jnp.dot(xn, w12_ref[...], preferred_element_type=jnp.float32)
    gu = gu + b12_ref[...].astype(jnp.float32)
    g = gu[:, :tf]                                 # pre-activation gate (SiLU)
    up = gu[:, tf:]                                # up projection

    gate = g * jax.nn.sigmoid(g)                   # SiLU in f32 (EUP)
    h = up * gate                                  # (tm, tf), f32

    # ---- partial down-projection: (tm, tf) @ (tf, H), accumulated in f32
    part = jnp.dot(h.astype(w3_ref.dtype), w3_ref[...],
                   preferred_element_type=jnp.float32)
    acc_ref[...] += part.astype(acc_ref.dtype)

    # ---- finalize (last F tile): bias + residual exactly once
    @pl.when(f == nf - 1)
    def _():
        extra = b3_ref[...].astype(jnp.float32) + x_ref[...].astype(jnp.float32)
        if acc_in_out:
            o_ref[...] += extra.astype(o_ref.dtype)
        else:
            o_ref[...] = (acc_ref[...] + extra).astype(o_ref.dtype)
        # TODO(synk): dropout omitted (eval-mode identity, matching model.eval()).


# ---------------------------------------------------------------------------
# Tiling helpers
# ---------------------------------------------------------------------------
def _pick_tf(F, target):
    """Largest multiple-of-128 F tile <= target dividing F, else the full F."""
    if F <= target:
        return F
    t = (min(target, F) // 128) * 128
    while t >= 128:
        if F % t == 0:
            return t
        t -= 128
    return F  # no clean 128-multiple divisor: fall back to a full-F block


def _pick_tm(M, target):
    """Token tile: `target` rows for big M; for mid-sized M split into >=2
    tiles so both TensorCores get work on v7x; small M -> one padded tile."""
    if M >= 2 * target:
        return target
    if M > 16:
        half = ((M + 1) // 2 + 7) // 8 * 8
        return min(max(half, 8), target)
    return ((M + 7) // 8) * 8


# ---------------------------------------------------------------------------
# One-time parameter preparation (transpose / fuse / tile / cast happen ONCE)
# ---------------------------------------------------------------------------
def prepare_ffn_params(params, *, weights_dtype=jnp.float32, target_tf=None):
    if target_tf is None:
        target_tf = _hw_budget()["target_tf"]

    F, H = params["w1"].shape          # nn.Linear: (out_features=F, in_features=H)
    tf = _pick_tf(F, target_tf)
    assert F % tf == 0
    nf = F // tf

    w1t = params["w1"].T               # (H, F)
    w2t = params["w2"].T               # (H, F)
    # Per-F-tile contiguous blocks: (nf, H, 2*tf) = [W1^T tile | W2^T tile]
    a = w1t.reshape(H, nf, tf).transpose(1, 0, 2)      # (nf, H, tf)
    b = w2t.reshape(H, nf, tf).transpose(1, 0, 2)      # (nf, H, tf)
    w12t = jnp.concatenate([a, b], axis=2)             # (nf, H, 2*tf)

    b1 = params["b1"].reshape(nf, 1, tf)
    b2 = params["b2"].reshape(nf, 1, tf)
    b12 = jnp.concatenate([b1, b2], axis=2)            # (nf, 1, 2*tf)

    w3t = params["w3"].T.reshape(nf, tf, H)            # (nf, tf, H)

    return {
        "hidden": H,
        "intermediate": F,
        "tf": tf,
        "wn": params["norm_w"].reshape(1, H).astype(jnp.float32),
        "w12t": w12t.astype(weights_dtype),            # streamed (bf16 for perf)
        "b12": b12.astype(jnp.float32),
        "w3t": w3t.astype(weights_dtype),              # streamed (bf16 for perf)
        "b3": params["b3"].reshape(1, H).astype(jnp.float32),
    }


# ---------------------------------------------------------------------------
# Forward wrapper
# ---------------------------------------------------------------------------
def ffn_forward(x, p, *, eps=1e-6, target_tm=None, vmem_limit_bytes=None):
    """x: (B, S, H).  p: output of prepare_ffn_params."""
    budget = _hw_budget()
    if target_tm is None:
        target_tm = budget["target_tm"]
    if vmem_limit_bytes is None:
        vmem_limit_bytes = budget["vmem_limit"]

    B, S, H = x.shape
    assert H == p["hidden"]
    F = p["intermediate"]
    tf = p["tf"]

    M = B * S
    tm = _pick_tm(M, target_tm)

    w_dtype = p["w12t"].dtype
    w_bytes = jnp.dtype(w_dtype).itemsize
    x_bytes = jnp.dtype(x.dtype).itemsize
    out_dtype = x.dtype
    out_bytes = jnp.dtype(out_dtype).itemsize
    acc_in_out = (out_dtype == jnp.float32)   # accumulate into the resident out block

    # Clamp tm so the double-buffered footprint stays inside the VMEM budget.
    while tm > 256 and _vmem_estimate(tm, tf, H, w_bytes, x_bytes, out_bytes,
                                      not acc_in_out) > 0.9 * vmem_limit_bytes:
        tm -= 128

    M_pad = ((M + tm - 1) // tm) * tm
    x2d = x.reshape(M, H)
    if M_pad != M:
        x2d = jnp.pad(x2d, ((0, M_pad - M), (0, 0)))

    nf = F // tf
    grid = (M_pad // tm, nf)   # token axis first (parallel), F axis last (reduction)

    scratch_shapes = [pltpu.VMEM((tm, H), w_dtype)]        # xn in weights dtype
    if not acc_in_out:
        scratch_shapes.append(pltpu.VMEM((tm, H), jnp.float32))

    out2d = pl.pallas_call(
        functools.partial(_ffn_kernel, eps=eps, tf=tf),
        out_shape=jax.ShapeDtypeStruct((M_pad, H), out_dtype),
        grid_spec=pltpu.PrefetchScalarGridSpec(
            num_scalar_prefetch=0,
            grid=grid,
            in_specs=[
                pl.BlockSpec((tm, H), lambda i, f: (i, 0)),                   # x tile
                pl.BlockSpec((1, H), lambda i, f: (0, 0)),                    # norm weight
                pl.BlockSpec((pl.Squeezed(), H, 2 * tf), lambda i, f: (f, 0, 0)),  # [W1^T|W2^T]
                pl.BlockSpec((pl.Squeezed(), 1, 2 * tf), lambda i, f: (f, 0, 0)),  # [b1|b2]
                pl.BlockSpec((pl.Squeezed(), tf, H), lambda i, f: (f, 0, 0)),      # W3^T tile
                pl.BlockSpec((1, H), lambda i, f: (0, 0)),                    # b3
            ],
            # Output last dim = H: lane-dense, VMEM-resident across the F axis.
            out_specs=pl.BlockSpec((tm, H), lambda i, f: (i, 0)),
            scratch_shapes=scratch_shapes,
        ),
        compiler_params=pltpu.CompilerParams(
            dimension_semantics=("parallel", "arbitrary"),
            vmem_limit_bytes=vmem_limit_bytes,
        ),
    )(x2d, p["wn"], p["w12t"], p["b12"], p["w3t"], p["b3"])

    if M_pad != M:
        out2d = out2d[:M]
    return out2d.reshape(B, S, H)


# ---------------------------------------------------------------------------
# Test harness
# ---------------------------------------------------------------------------
def _init_params(key, hidden, intermediate):
    ks = jax.random.split(key, 6)
    lim1 = 1.0 / jnp.sqrt(hidden)
    lim3 = 1.0 / jnp.sqrt(intermediate)
    return {
        "norm_w": jnp.ones((hidden,), jnp.float32),
        "w1": jax.random.uniform(ks[0], (intermediate, hidden), jnp.float32, -lim1, lim1),
        "b1": jax.random.uniform(ks[1], (intermediate,), jnp.float32, -lim1, lim1),
        "w2": jax.random.uniform(ks[2], (intermediate, hidden), jnp.float32, -lim1, lim1),
        "b2": jax.random.uniform(ks[3], (intermediate,), jnp.float32, -lim1, lim1),
        "w3": jax.random.uniform(ks[4], (hidden, intermediate), jnp.float32, -lim3, lim3),
        "b3": jax.random.uniform(ks[5], (hidden,), jnp.float32, -lim3, lim3),
    }


def _reference(x, p, eps):
    # Pure-JAX reference of the PyTorch forward (eval mode).
    rms = jnp.sqrt(jnp.mean(x ** 2, axis=-1, keepdims=True) + eps)
    xn = x / rms * p["norm_w"]
    g = xn @ p["w1"].T + p["b1"]
    gate = g * jax.nn.sigmoid(g)
    up = xn @ p["w2"].T + p["b2"]
    out = (up * gate) @ p["w3"].T + p["b3"]
    return out + x


if __name__ == "__main__":
    B, S, H, F = 2, 8, 32, 64
    eps = 1e-6

    key = jax.random.PRNGKey(0)
    kx, kp = jax.random.split(key)
    x = jax.random.normal(kx, (B, S, H), jnp.float32)
    params = _init_params(kp, H, F)

    ref = _reference(x, params, eps)

    # f32 weight path: strict semantics check against the PyTorch-equivalent reference.
    p_f32 = prepare_ffn_params(params, weights_dtype=jnp.float32)
    out = jax.block_until_ready(ffn_forward(x, p_f32, eps=eps))
    assert out.shape == (B, S, H)
    assert jnp.allclose(out, ref, atol=1e-4, rtol=1e-4), "f32 mismatch vs reference"

    # bf16 weight-streaming path (the perf configuration): looser tolerance.
    p_bf16 = prepare_ffn_params(params, weights_dtype=jnp.bfloat16)
    out_bf16 = jax.block_until_ready(ffn_forward(x, p_bf16, eps=eps))
    assert jnp.allclose(out_bf16, ref, atol=5e-2, rtol=5e-2), "bf16 mismatch vs reference"

    print("KERNEL_OK")
</pallas_src>

<mosaic_0001>
module attributes {stable_mosaic.version = 11 : i64} {
  func.func @_ffn_kernel(%arg0: i32, %arg1: i32, %arg2: memref<16x32xf32, #tpu.memory_space<vmem>>, %arg3: memref<1x32xf32, #tpu.memory_space<vmem>>, %arg4: memref<1x32x128xf32, #tpu.memory_space<vmem>>, %arg5: memref<1x1x128xf32, #tpu.memory_space<vmem>>, %arg6: memref<1x64x32xf32, #tpu.memory_space<vmem>>, %arg7: memref<1x32xf32, #tpu.memory_space<vmem>>, %arg8: memref<16x32xf32, #tpu.memory_space<vmem>>, %arg9: memref<16x32xf32, #tpu.memory_space<vmem>>) attributes {dimension_semantics = [#tpu.dimension_semantics<parallel>, #tpu.dimension_semantics<arbitrary>], iteration_bounds = array<i64: 1, 1>, scalar_prefetch = 0 : i64, scratch_operands = 1 : i64, tpu.core_type = #tpu.core_type<tc>, window_params = [{transform_indices = @transform_0, window_bounds = array<i64: 16, 32>}, {pipeline_mode = #tpu.pipeline_mode<synchronous>, transform_indices = @transform_1, window_bounds = array<i64: 1, 32>}, {transform_indices = @transform_2, window_bounds = array<i64: 1, 32, 128>}, {transform_indices = @transform_3, window_bounds = array<i64: 1, 1, 128>}, {transform_indices = @transform_4, window_bounds = array<i64: 1, 64, 32>}, {pipeline_mode = #tpu.pipeline_mode<synchronous>, transform_indices = @transform_5, window_bounds = array<i64: 1, 32>}, {transform_indices = @transform_6, window_bounds = array<i64: 16, 32>}]} {
    %c0_i32 = arith.constant 0 : i32
    %0 = arith.cmpi eq, %arg1, %c0_i32 : i32
    %1 = arith.extui %0 : i1 to i32
    %c0_i32_0 = arith.constant 0 : i32
    %2 = arith.cmpi ne, %1, %c0_i32_0 : i32
    scf.if %2 {
      %c0_19 = arith.constant 0 : index
      %c0_20 = arith.constant 0 : index
      %29 = vector.load %arg2[%c0_19, %c0_20] : memref<16x32xf32, #tpu.memory_space<vmem>>, vector<16x32xf32>
      %30 = arith.mulf %29, %29 : vector<16x32xf32>
      %cst_21 = arith.constant dense<0.000000e+00> : vector<16xf32>
      %31 = vector.multi_reduction <add>, %30, %cst_21 [1] : vector<16x32xf32> to vector<16xf32>
      %32 = vector.shape_cast %31 : vector<16xf32> to vector<16x1xf32>
      %cst_22 = arith.constant 3.200000e+01 : f32
      %33 = vector.broadcast %cst_22 : f32 to vector<16x1xf32>
      %34 = arith.divf %32, %33 : vector<16x1xf32>
      %cst_23 = arith.constant 9.99999997E-7 : f32
      %35 = vector.broadcast %cst_23 : f32 to vector<16x1xf32>
      %36 = arith.addf %34, %35 : vector<16x1xf32>
      %37 = math.rsqrt %36 : vector<16x1xf32>
      %38 = vector.broadcast %37 : vector<16x1xf32> to vector<16x32xf32>
      %39 = arith.mulf %29, %38 : vector<16x32xf32>
      %c0_24 = arith.constant 0 : index
      %c0_25 = arith.constant 0 : index
      %40 = vector.load %arg3[%c0_24, %c0_25] : memref<1x32xf32, #tpu.memory_space<vmem>>, vector<1x32xf32>
      %41 = vector.broadcast %40 : vector<1x32xf32> to vector<16x32xf32>
      %42 = arith.mulf %39, %41 : vector<16x32xf32>
      %c0_26 = arith.constant 0 : index
      %c0_27 = arith.constant 0 : index
      %43 = vector.load %arg9[%c0_26, %c0_27] : memref<16x32xf32, #tpu.memory_space<vmem>>, vector<16x32xf32>
      tpu.vector_store %arg9[%c0_26, %c0_27], %42 {strides = array<i32>} : memref<16x32xf32, #tpu.memory_space<vmem>>, vector<16x32xf32>,
      %cst_28 = arith.constant 0.000000e+00 : f32
      %44 = vector.broadcast %cst_28 : f32 to vector<16x32xf32>
      %c0_29 = arith.constant 0 : index
      %c0_30 = arith.constant 0 : index
      %45 = vector.load %arg8[%c0_29, %c0_30] : memref<16x32xf32, #tpu.memory_space<vmem>>, vector<16x32xf32>
      tpu.vector_store %arg8[%c0_29, %c0_30], %44 {strides = array<i32>} : memref<16x32xf32, #tpu.memory_space<vmem>>, vector<16x32xf32>,
    } else {
    }
    %c0 = arith.constant 0 : index
    %c0_1 = arith.constant 0 : index
    %3 = vector.load %arg9[%c0, %c0_1] : memref<16x32xf32, #tpu.memory_space<vmem>>, vector<16x32xf32>
    %c0_2 = arith.constant 0 : index
    %c0_3 = arith.constant 0 : index
    %c0_4 = arith.constant 0 : index
    %4 = vector.load %arg4[%c0_2, %c0_3, %c0_4] : memref<1x32x128xf32, #tpu.memory_space<vmem>>, vector<1x32x128xf32>
    %5 = vector.shape_cast %4 : vector<1x32x128xf32> to vector<32x128xf32>
    %cst = arith.constant dense<0.000000e+00> : vector<16x128xf32>
    %6 = tpu.matmul %3, %5, %cst {dimension_numbers = #tpu.dot_dimension_numbers<[1], [0], [0], [1], [0, 0, 1, 1], [], []>} : vector<16x32xf32>, vector<32x128xf32>, vector<16x128xf32> -> vector<16x128xf32>
    %c0_5 = arith.constant 0 : index
    %c0_6 = arith.constant 0 : index
    %c0_7 = arith.constant 0 : index
    %7 = vector.load %arg5[%c0_5, %c0_6, %c0_7] : memref<1x1x128xf32, #tpu.memory_space<vmem>>, vector<1x1x128xf32>
    %8 = vector.shape_cast %7 : vector<1x1x128xf32> to vector<1x128xf32>
    %9 = vector.broadcast %8 : vector<1x128xf32> to vector<16x128xf32>
    %10 = arith.addf %6, %9 : vector<16x128xf32>
    %11 = vector.extract_strided_slice %10 {offsets = [0, 0], sizes = [16, 64], strides = [1, 1]} : vector<16x128xf32> to vector<16x64xf32>
    %12 = vector.extract_strided_slice %10 {offsets = [0, 64], sizes = [16, 64], strides = [1, 1]} : vector<16x128xf32> to vector<16x64xf32>
    %13 = arith.negf %11 : vector<16x64xf32>
    %14 = math.exp %13 : vector<16x64xf32>
    %cst_8 = arith.constant 1.000000e+00 : f32
    %15 = vector.broadcast %cst_8 : f32 to vector<16x64xf32>
    %16 = arith.addf %15, %14 : vector<16x64xf32>
    %17 = arith.divf %15, %16 : vector<16x64xf32>
    %18 = arith.mulf %11, %17 : vector<16x64xf32>
    %19 = arith.mulf %12, %18 : vector<16x64xf32>
    %c0_9 = arith.constant 0 : index
    %c0_10 = arith.constant 0 : index
    %c0_11 = arith.constant 0 : index
    %20 = vector.load %arg6[%c0_9, %c0_10, %c0_11] : memref<1x64x32xf32, #tpu.memory_space<vmem>>, vector<1x64x32xf32>
    %21 = vector.shape_cast %20 : vector<1x64x32xf32> to vector<64x32xf32>
    %cst_12 = arith.constant dense<0.000000e+00> : vector<16x32xf32>
    %22 = tpu.matmul %19, %21, %cst_12 {dimension_numbers = #tpu.dot_dimension_numbers<[1], [0], [0], [1], [0, 0, 1, 1], [], []>} : vector<16x64xf32>, vector<64x32xf32>, vector<16x32xf32> -> vector<16x32xf32>
    %c0_13 = arith.constant 0 : index
    %c0_14 = arith.constant 0 : index
    %23 = vector.load %arg8[%c0_13, %c0_14] : memref<16x32xf32, #tpu.memory_space<vmem>>, vector<16x32xf32>
    %24 = arith.addf %23, %22 : vector<16x32xf32>
    %c0_15 = arith.constant 0 : index
    %c0_16 = arith.constant 0 : index
    %25 = vector.load %arg8[%c0_15, %c0_16] : memref<16x32xf32, #tpu.memory_space<vmem>>, vector<16x32xf32>
    tpu.vector_store %arg8[%c0_15, %c0_16], %24 {strides = array<i32>} : memref<16x32xf32, #tpu.memory_space<vmem>>, vector<16x32xf32>,
    %c0_i32_17 = arith.constant 0 : i32
    %26 = arith.cmpi eq, %arg1, %c0_i32_17 : i32
    %27 = arith.extui %26 : i1 to i32
    %c0_i32_18 = arith.constant 0 : i32
    %28 = arith.cmpi ne, %27, %c0_i32_18 : i32
    scf.if %28 {
      %c0_19 = arith.constant 0 : index
      %c0_20 = arith.constant 0 : index
      %29 = vector.load %arg7[%c0_19, %c0_20] : memref<1x32xf32, #tpu.memory_space<vmem>>, vector<1x32xf32>
      %c0_21 = arith.constant 0 : index
      %c0_22 = arith.constant 0 : index
      %30 = vector.load %arg2[%c0_21, %c0_22] : memref<16x32xf32, #tpu.memory_space<vmem>>, vector<16x32xf32>
      %31 = vector.broadcast %29 : vector<1x32xf32> to vector<16x32xf32>
      %32 = arith.addf %31, %30 : vector<16x32xf32>
      %c0_23 = arith.constant 0 : index
      %c0_24 = arith.constant 0 : index
      %33 = vector.load %arg8[%c0_23, %c0_24] : memref<16x32xf32, #tpu.memory_space<vmem>>, vector<16x32xf32>
      %34 = arith.addf %33, %32 : vector<16x32xf32>
      %c0_25 = arith.constant 0 : index
      %c0_26 = arith.constant 0 : index
      %35 = vector.load %arg8[%c0_25, %c0_26] : memref<16x32xf32, #tpu.memory_space<vmem>>, vector<16x32xf32>
      tpu.vector_store %arg8[%c0_25, %c0_26], %34 {strides = array<i32>} : memref<16x32xf32, #tpu.memory_space<vmem>>, vector<16x32xf32>,
    } else {
    }
    return
  }
  func.func @transform_0(%arg0: i32, %arg1: i32) -> (i32, i32) {
    %c0_i32 = arith.constant 0 : i32
    %c0_i32_0 = arith.constant 0 : i32
    return %arg0, %c0_i32 : i32, i32
  }
  func.func @transform_1(%arg0: i32, %arg1: i32) -> (i32, i32) {
    %c0_i32 = arith.constant 0 : i32
    %c0_i32_0 = arith.constant 0 : i32
    %c0_i32_1 = arith.constant 0 : i32
    return %c0_i32, %c0_i32_0 : i32, i32
  }
  func.func @transform_2(%arg0: i32, %arg1: i32) -> (i32, i32, i32) {
    %c0_i32 = arith.constant 0 : i32
    %c0_i32_0 = arith.constant 0 : i32
    %c0_i32_1 = arith.constant 0 : i32
    return %arg1, %c0_i32, %c0_i32_0 : i32, i32, i32
  }
  func.func @transform_3(%arg0: i32, %arg1: i32) -> (i32, i32, i32) {
    %c0_i32 = arith.constant 0 : i32
    %c0_i32_0 = arith.constant 0 : i32
    %c0_i32_1 = arith.constant 0 : i32
    return %arg1, %c0_i32, %c0_i32_0 : i32, i32, i32
  }
  func.func @transform_4(%arg0: i32, %arg1: i32) -> (i32, i32, i32) {
    %c0_i32 = arith.constant 0 : i32
    %c0_i32_0 = arith.constant 0 : i32
    %c0_i32_1 = arith.constant 0 : i32
    return %arg1, %c0_i32, %c0_i32_0 : i32, i32, i32
  }
  func.func @transform_5(%arg0: i32, %arg1: i32) -> (i32, i32) {
    %c0_i32 = arith.constant 0 : i32
    %c0_i32_0 = arith.constant 0 : i32
    %c0_i32_1 = arith.constant 0 : i32
    return %c0_i32, %c0_i32_0 : i32, i32
  }
  func.func @transform_6(%arg0: i32, %arg1: i32) -> (i32, i32) {
    %c0_i32 = arith.constant 0 : i32
    %c0_i32_0 = arith.constant 0 : i32
    return %arg0, %c0_i32 : i32, i32
  }
}

</mosaic_0001>

<llo_original>
// kernel: tpu_custom_call.1
$region0: #{tpu_custom_call.1}
  #allocation0 [shape = 'u32[]', space=smem, size = 0x4, offset = 0x4, fixed_abs, tag = 'smem constant byte address 0x4 - core index']
  #allocation1 [shape = 'u32[144,128]{1,0:T(1,128)}', space=vmem, size = 0x12000, scoped, tag = 'internal scratch']
  #allocation2 [shape = 'f32[16,32]{1,0:T(8,128)}', space=vmem, size = 0x2000, scoped, tag = 'scratch operand']
  %s0 = inlined_call_operand.vmem [shape: f32[16,32], index: 0, kind: input, shape index: {}]
  %s1 = inlined_call_operand.vmem [shape: f32[1,32], index: 1, kind: input, shape index: {}]
  %s2 = inlined_call_operand.vmem [shape: f32[1,32,128], index: 2, kind: input, shape index: {}]
  %s3 = inlined_call_operand.vmem [shape: f32[1,1,128], index: 3, kind: input, shape index: {}]
  %s4 = inlined_call_operand.vmem [shape: f32[1,64,32], index: 4, kind: input, shape index: {}]
  %s5 = inlined_call_operand.vmem [shape: f32[1,32], index: 5, kind: input, shape index: {}]
  %s6 = inlined_call_operand.hbm [shape: f32[16,32], index: 6, kind: output, shape index: {}]
  %s7 = sld [smem:[#allocation0]]
  $region42: #{tpu_custom_call.1} parent=0
    _
  %s9 = ssub.s32 1, %s7
  %s10 = scalar_select 0, %s9, %s7
  $region1: #{tpu_custom_call.1} parent=0
    #allocation3 [shape = 'u8[8192]{0}', space=vmem, size = 0x2000, scoped, tag = 'output window, operand 0, single buffered']
    #allocation4 [shape = 's32[1]{0}', space=sflag, size = 0x4, scoped, tag = 'scoped memory for tpu_custom_call.1']
    %11 = vsyncpa [#allocation4], 0
    // Predicated region
    $region2: #{tpu_custom_call.1} parent=1 // pred_check
      _
    $region3: #{tpu_custom_call.1} parent=1 // pred_check_branch
      %13 = sbr.rel (0) target = $region5
    $region4: #{tpu_custom_call.1} parent=1 // pred_region
      _
    $region5: #{tpu_custom_call.1} parent=1 // pred_fallthru
      _
    // Predicated region
    $region6: #{tpu_custom_call.1} parent=1 // pred_check
      _
    $region7: #{tpu_custom_call.1} parent=1 // pred_check_branch
      %15 = sbr.rel (0) target = $region9
    $region8: #{tpu_custom_call.1} parent=1 // pred_region
      _
    $region9: #{tpu_custom_call.1} parent=1 // pred_fallthru
      _
    // Predicated region
    $region10: #{tpu_custom_call.1} parent=1 // pred_check
      _
    $region11: #{tpu_custom_call.1} parent=1 // pred_check_branch
      %17 = sbr.rel (0) target = $region13
    $region12: #{tpu_custom_call.1} parent=1 // pred_region
      _
    $region13: #{tpu_custom_call.1} parent=1 // pred_fallthru
      _
    // Predicated region
    $region14: #{tpu_custom_call.1} parent=1 // pred_check
      _
    $region15: #{tpu_custom_call.1} parent=1 // pred_check_branch
      %19 = sbr.rel (0) target = $region17
    $region16: #{tpu_custom_call.1} parent=1 // pred_region
      _
    $region17: #{tpu_custom_call.1} parent=1 // pred_fallthru
      _
    // Predicated region
    $region18: #{tpu_custom_call.1} parent=1 // pred_check
      _
    $region19: #{tpu_custom_call.1} parent=1 // pred_check_branch
      %21 = sbr.rel (0) target = $region21
    $region20: #{tpu_custom_call.1} parent=1 // pred_region
      _
    $region21: #{tpu_custom_call.1} parent=1 // pred_fallthru
      _
    // Predicated region
    $region22: #{tpu_custom_call.1} parent=1 // pred_check
      _
    $region23: #{tpu_custom_call.1} parent=1 // pred_check_branch
      %23 = sbr.rel (0) target = $region25
    $region24: #{tpu_custom_call.1} parent=1 // pred_region
      _
    $region25: #{tpu_custom_call.1} parent=1 // pred_fallthru
      _
    %p24 = scmp.eq.s32.totalorder 0, 0
    // Predicated region
    $region26: #{tpu_custom_call.1} parent=1 // pred_check
      %p25 = pneg %p24
    $region27: #{tpu_custom_call.1} parent=1 // pred_check_branch
      %27 = sbr.rel (%p25) target = $region29
    $region28: #{tpu_custom_call.1} parent=1 // pred_region
      %v28 = vld [vmem:[%s0] sm:$0xff]
      %v29 = vld [vmem:[%s0 + $0x8] sm:$0xff]
      %v30 = vmul.f32 %v28, %v28
      %v31 = vmul.f32 %v29, %v29
      %vm32 = vcmask 261120
      %v33 = vsel %vm32, %v30, 0.0
      %34 = vadd.xlane.f32.xlu0 %v33
      %v35 = vpop.xlane.xlu0 %34
      %v36 = vsel %vm32, %v31, 0.0
      %37 = vadd.xlane.f32.xlu0 %v36
      %v38 = vpop.xlane.xlu0 %37
      %v39 = vrcp.pop 32.0
      %v40 = vmul.f32 %v35, %v39
      %v41 = vmul.f32 %v38, %v39
      %v42 = vadd.f32 %v40, 1e-06
      %v43 = vadd.f32 %v41, 1e-06
      %v44 = vrsqrt.pop %v42
      %v45 = vrsqrt.pop %v43
      %v46 = vmul.f32 %v28, %v44
      %v47 = vmul.f32 %v29, %v45
      %v48 = vld [vmem:[%s1] sm:$0x1]
      %v50 = vlaneseq
      %v51 = vshrl.u32 %v50, 7
      %v52 = vsub.s32 0, %v51
      %v53 = vrot.slane %v48, %v52
      %v55 = vmul.f32 %v46, %v53
      %v56 = vmul.f32 %v47, %v53
      %57 = vst.msk [vmem:[#allocation2] sm:$0xff] %vm32, %v55
      %58 = vst.msk [vmem:[#allocation2 + $0x8] sm:$0xff] %vm32, %v56
      %59 = vst.msk [vmem:[#allocation3] sm:$0xff] %vm32, 0.0
      %60 = vst.msk [vmem:[#allocation3 + $0x8] sm:$0xff] %vm32, 0.0
    $region29: #{tpu_custom_call.1} parent=1 // pred_fallthru
      _
    %v61 = vld [vmem:[#allocation2] sm:$0xff]
    %v62 = vld [vmem:[#allocation2 + $0x8] sm:$0xff]
    %v63 = vld [vmem:[%s2] sm:$0xff]
    %v64 = vld [vmem:[%s2 + $0x8] sm:$0xff]
    %v65 = vld [vmem:[%s2 + $0x10] sm:$0xff]
    %v66 = vld [vmem:[%s2 + $0x18] sm:$0xff]
    %v67 = vld [vmem:[%s3] sm:$0x1]
    %v69 = vlaneseq
    %v70 = vshrl.u32 %v69, 7
    %v71 = vsub.s32 0, %v70
    %v72 = vrot.slane %v67, %v71
    %vm74 = vcmask 261120
    %v76 = vsel %vm74, %v61, 0
    %v79 = vsel %vm74, %v62, 0
    %81 = vmatprep.subr.mxu0 0.0
    %82 = vmatpush1.msra.mxu0 0.0
    %83 = vmatprep.subr.mxu0 0.0
    %84 = vmatpush1.msra.mxu0 0.0
    %85 = vmatprep.subr.mxu0 0.0
    %86 = vmatpush1.msra.mxu0 0.0
    %87 = vmatprep.subr.mxu0 0.0
    %88 = vmatpush1.msra.mxu0 0.0
    %89 = vmatprep.subr.mxu0 0.0
    %90 = vmatpush1.msra.mxu0 0.0
    %91 = vmatprep.subr.mxu0 0.0
    %92 = vmatpush1.msra.mxu0 0.0
    %93 = vmatprep.subr.mxu0 0.0
    %94 = vmatpush1.msra.mxu0 0.0
    %95 = vmatprep.subr.mxu0 0.0
    %96 = vmatpush1.msra.mxu0 0.0
    %97 = vmatprep.subr.mxu0 0.0
    %98 = vmatpush1.msra.mxu0 0.0
    %99 = vmatprep.subr.mxu0 0.0
    %100 = vmatpush1.msra.mxu0 0.0
    %101 = vmatprep.subr.mxu0 0.0
    %102 = vmatpush1.msra.mxu0 0.0
    %103 = vmatprep.subr.mxu0 0.0
    %104 = vmatpush1.msra.mxu0 0.0
    %105 = vmatprep.subr.mxu0 0.0
    %106 = vmatpush1.msra.mxu0 %v66
    %107 = vmatprep.subr.mxu0 0.0
    %108 = vmatpush1.msra.mxu0 %v65
    %109 = vmatprep.subr.mxu0 0.0
    %110 = vmatpush1.msra.mxu0 %v64
    %111 = vmatprep.subr.mxu0 0.0
    %112 = vmatpush1.msra.mxu0 %v63
    %113 = vmatprep.subr.mxu0 0.0
    %114 = vmatpush2.msra.mxu0 0.0
    %115 = vmatprep.subr.mxu0 0.0
    %116 = vmatpush2.msra.mxu0 0.0
    %117 = vmatprep.subr.mxu0 0.0
    %118 = vmatpush2.msra.mxu0 0.0
    %119 = vmatprep.subr.mxu0 0.0
    %120 = vmatpush2.msra.mxu0 0.0
    %121 = vmatprep.subr.mxu0 0.0
    %122 = vmatpush2.msra.mxu0 0.0
    %123 = vmatprep.subr.mxu0 0.0
    %124 = vmatpush2.msra.mxu0 0.0
    %125 = vmatprep.subr.mxu0 0.0
    %126 = vmatpush2.msra.mxu0 0.0
    %127 = vmatprep.subr.mxu0 0.0
    %128 = vmatpush2.msra.mxu0 0.0
    %129 = vmatprep.subr.mxu0 0.0
    %130 = vmatpush2.msra.mxu0 0.0
    %131 = vmatprep.subr.mxu0 0.0
    %132 = vmatpush2.msra.mxu0 0.0
    %133 = vmatprep.subr.mxu0 0.0
    %134 = vmatpush2.msra.mxu0 0.0
    %135 = vmatprep.subr.mxu0 0.0
    %136 = vmatpush2.msra.mxu0 0.0
    %137 = vmatprep.subr.mxu0 0.0
    %138 = vmatpush2.msra.mxu0 0.0
    %139 = vmatprep.subr.mxu0 0.0
    %140 = vmatpush2.msra.mxu0 0.0
    %141 = vmatprep.subr.mxu0 0.0
    %142 = vmatpush2.msra.mxu0 0.0
    %143 = vmatprep.subr.mxu0 0.0
    %144 = vmatpush2.msra.mxu0 0.0
    %145 = vmatprep.mubr.f32.mxu0 0.0
    %146 = vmatmul.mubr.f32.gmra.mxu0 %v76
    %v147 = vpop.f32.mrf.mxu0
    %v148 = vadd.f32 %v72, %v147
    %v149 = vpop.f32.mrf.mxu0
    %150 = vmatprep.mubr.f32.mxu0 0.0
    %151 = vmatmul.mubr.f32.gmra.mxu0 %v79
    %v152 = vpop.f32.mrf.mxu0
    %v153 = vadd.f32 %v72, %v152
    %v154 = vpop.f32.mrf.mxu0
    %155 = vdwg.mxu0
    %v156 = vxor.u32 %v148, 2147483648
    %v157 = vxor.u32 %v153, 2147483648
    %v158 = vmul.f32 %v156, 1.442695
    %v159 = vpow.pop %v158
    %v160 = vmul.f32 %v157, 1.442695
    %v161 = vpow.pop %v160
    %v162 = vadd.f32 %v159, 1.0
    %v163 = vadd.f32 %v161, 1.0
    %v164 = vrcp.pop %v162
    %v165 = vmul.f32 1.0, %v164
    %v166 = vrcp.pop %v163
    %v167 = vmul.f32 1.0, %v166
    %v168 = vmul.f32 %v148, %v165
    %v169 = vmul.f32 %v153, %v167
    %172 = vrot.lane.b32.xlu0 %v168, 64
    %v173 = vpop.permute.xlu0 %172
    %174 = vrot.lane.b32.xlu0 %v169, 64
    %v175 = vpop.permute.xlu0 %174
    %v178 = vmul.f32 %v148, %v173
    %v179 = vmul.f32 %v153, %v175
    %v180 = vld [vmem:[%s4] sm:$0xff]
    %v181 = vld [vmem:[%s4 + $0x8] sm:$0xff]
    %v182 = vld [vmem:[%s4 + $0x10] sm:$0xff]
    %v183 = vld [vmem:[%s4 + $0x18] sm:$0xff]
    %v184 = vld [vmem:[%s4 + $0x20] sm:$0xff]
    %v185 = vld [vmem:[%s4 + $0x28] sm:$0xff]
    %v186 = vld [vmem:[%s4 + $0x30] sm:$0xff]
    %v187 = vld [vmem:[%s4 + $0x38] sm:$0xff]
    %190 = vrot.lane.b32.xlu0 %v178, 64
    %v191 = vpop.permute.xlu0 %190
    %192 = vrot.lane.b32.xlu0 %v179, 64
    %v193 = vpop.permute.xlu0 %192
    %vm194 = vcmask 523264
    %v195 = vsel %vm194, %v191, 0
    %v197 = vsel %vm194, %v193, 0
    %199 = vmatprep.subr.mxu0 0.0
    %200 = vmatpush1.msra.mxu0 0.0
    %201 = vmatprep.subr.mxu0 0.0
    %202 = vmatpush1.msra.mxu0 0.0
    %203 = vmatprep.subr.mxu0 0.0
    %204 = vmatpush1.msra.mxu0 0.0
    %205 = vmatprep.subr.mxu0 0.0
    %206 = vmatpush1.msra.mxu0 0.0
    %207 = vmatprep.subr.mxu0 0.0
    %208 = vmatpush1.msra.mxu0 0.0
    %209 = vmatprep.subr.mxu0 0.0
    %210 = vmatpush1.msra.mxu0 0.0
    %211 = vmatprep.subr.mxu0 0.0
    %212 = vmatpush1.msra.mxu0 0.0
    %213 = vmatprep.subr.mxu0 0.0
    %214 = vmatpush1.msra.mxu0 0.0
    %215 = vmatprep.subr.mxu0 0.0
    %216 = vmatpush1.msra.mxu0 %v187
    %217 = vmatprep.subr.mxu0 0.0
    %218 = vmatpush1.msra.mxu0 %v186
    %219 = vmatprep.subr.mxu0 0.0
    %220 = vmatpush1.msra.mxu0 %v185
    %221 = vmatprep.subr.mxu0 0.0
    %222 = vmatpush1.msra.mxu0 %v184
    %223 = vmatprep.subr.mxu0 0.0
    %224 = vmatpush1.msra.mxu0 %v183
    %225 = vmatprep.subr.mxu0 0.0
    %226 = vmatpush1.msra.mxu0 %v182
    %227 = vmatprep.subr.mxu0 0.0
    %228 = vmatpush1.msra.mxu0 %v181
    %229 = vmatprep.subr.mxu0 0.0
    %230 = vmatpush1.msra.mxu0 %v180
    %231 = vmatprep.subr.mxu0 0.0
    %232 = vmatpush2.msra.mxu0 0.0
    %233 = vmatprep.subr.mxu0 0.0
    %234 = vmatpush2.msra.mxu0 0.0
    %235 = vmatprep.subr.mxu0 0.0
    %236 = vmatpush2.msra.mxu0 0.0
    %237 = vmatprep.subr.mxu0 0.0
    %238 = vmatpush2.msra.mxu0 0.0
    %239 = vmatprep.subr.mxu0 0.0
    %240 = vmatpush2.msra.mxu0 0.0
    %241 = vmatprep.subr.mxu0 0.0
    %242 = vmatpush2.msra.mxu0 0.0
    %243 = vmatprep.subr.mxu0 0.0
    %244 = vmatpush2.msra.mxu0 0.0
    %245 = vmatprep.subr.mxu0 0.0
    %246 = vmatpush2.msra.mxu0 0.0
    %247 = vmatprep.subr.mxu0 0.0
    %248 = vmatpush2.msra.mxu0 0.0
    %249 = vmatprep.subr.mxu0 0.0
    %250 = vmatpush2.msra.mxu0 0.0
    %251 = vmatprep.subr.mxu0 0.0
    %252 = vmatpush2.msra.mxu0 0.0
    %253 = vmatprep.subr.mxu0 0.0
    %254 = vmatpush2.msra.mxu0 0.0
    %255 = vmatprep.subr.mxu0 0.0
    %256 = vmatpush2.msra.mxu0 0.0
    %257 = vmatprep.subr.mxu0 0.0
    %258 = vmatpush2.msra.mxu0 0.0
    %259 = vmatprep.subr.mxu0 0.0
    %260 = vmatpush2.msra.mxu0 0.0
    %261 = vmatprep.subr.mxu0 0.0
    %262 = vmatpush2.msra.mxu0 0.0
    %263 = vmatprep.mubr.f32.mxu0 0.0
    %264 = vmatmul.mubr.f32.gmra.mxu0 %v195
    %v265 = vpop.f32.mrf.mxu0
    %v266 = vadd.f32 0.0, %v265
    %v267 = vpop.f32.mrf.mxu0
    %268 = vmatprep.mubr.f32.mxu0 0.0
    %269 = vmatmul.mubr.f32.gmra.mxu0 %v197
    %v270 = vpop.f32.mrf.mxu0
    %v271 = vadd.f32 0.0, %v270
    %v272 = vpop.f32.mrf.mxu0
    %273 = vdwg.mxu0
    %v274 = vld [vmem:[#allocation3] sm:$0xff]
    %v275 = vld [vmem:[#allocation3 + $0x8] sm:$0xff]
    %v276 = vadd.f32 %v274, %v266
    %v277 = vadd.f32 %v275, %v271
    %278 = vst.msk [vmem:[#allocation3] sm:$0xff] %vm74, %v276
    %279 = vst.msk [vmem:[#allocation3 + $0x8] sm:$0xff] %vm74, %v277
    // Predicated region
    $region30: #{tpu_custom_call.1} parent=1 // pred_check
      %p280 = pneg %p24
    $region31: #{tpu_custom_call.1} parent=1 // pred_check_branch
      %282 = sbr.rel (%p280) target = $region33
    $region32: #{tpu_custom_call.1} parent=1 // pred_region
      %v283 = vld [vmem:[%s5] sm:$0x1]
      %v284 = vld [vmem:[%s0] sm:$0xff]
      %v285 = vld [vmem:[%s0 + $0x8] sm:$0xff]
      %v287 = vlaneseq
      %v288 = vshrl.u32 %v287, 7
      %v289 = vsub.s32 0, %v288
      %v290 = vrot.slane %v283, %v289
      %v292 = vadd.f32 %v290, %v284
      %v293 = vadd.f32 %v290, %v285
      %v294 = vld [vmem:[#allocation3] sm:$0xff]
      %v295 = vld [vmem:[#allocation3 + $0x8] sm:$0xff]
      %v296 = vadd.f32 %v294, %v292
      %v297 = vadd.f32 %v295, %v293
      %298 = vst.msk [vmem:[#allocation3] sm:$0xff] %vm74, %v296
      %299 = vst.msk [vmem:[#allocation3 + $0x8] sm:$0xff] %vm74, %v297
    $region33: #{tpu_custom_call.1} parent=1 // pred_fallthru
      _
    // Predicated region
    $region34: #{tpu_custom_call.1} parent=1 // pred_check
      _
    $region35: #{tpu_custom_call.1} parent=1 // pred_check_branch
      %301 = sbr.rel (0) target = $region37
    $region36: #{tpu_custom_call.1} parent=1 // pred_region
      %s303 = ssub.s32 256, 256
      %304 = vsyncadd [#allocation4], %s303
      %s305 = sshll.u32 [#allocation3], 4
      %s306 = int_to_ptr.vmem [resolvable:$true] %s305
      %311 = dma.vmem_to_hbm [thread:$0]  %s306, 256, %s6, [#allocation4], 128, 128, 8
    $region37: #{tpu_custom_call.1} parent=1 // pred_fallthru
      _
    // Predicated region
    $region38: #{tpu_custom_call.1} parent=1 // pred_check
      _
    $region39: #{tpu_custom_call.1} parent=1 // pred_check_branch
      %313 = sbr.rel (0) target = $region41
    $region40: #{tpu_custom_call.1} parent=1 // pred_region
      %314 = dma.done [#allocation4], 256
    $region41: #{tpu_custom_call.1} parent=1 // pred_fallthru
      _
    %315 = vsyncpa [#allocation4], 1

</llo_original>
